<compile_context>
chip_gen: v7x
topology: tpu7x:2x2x1
jax: 0.10.0
libtpu: 0.0.40
codegen_flags: <defaults>
</compile_context>

<pallas_src>
import functools

import jax
import jax.numpy as jnp
import numpy as np
from jax import lax
from jax.experimental import pallas as pl
from jax.experimental.pallas import tpu as pltpu

ALPHA = 0.25                        # config['alpha']
GAMMA = 2.0                         # config['gamma']
ALPHAS = (0.1, 0.2, 1.0, 0.3, 0.2)  # per-class alphas used in AuxLoss.forward


def _aux_loss_kernel(cls_ref, reg_p_ref, reg_t_ref, aux_ref, out_ref, *,
                     num_classes, gamma, alpha, alphas, hw, tile):
    """Accumulates per-pixel partial sums of all three loss terms.

    Output rows (each (1, tile), lane-summed afterwards in JAX):
      0: focal loss at the target class, masked by (sub_map == 1)
      1: count of (sub_map == 1) pixels
      2: smooth-L1 summed over reg channels, masked by (cls_tgt>0 & sub_map==1)
      3: count of (cls_tgt>0 & sub_map==1) pixels
      4: BCE-with-logits per occupancy element (valid pixels only)
      5: count of valid (non-padding) pixels
      6,7: unused (kept so the output block is 8 sublanes tall)
    """
    t = pl.program_id(1)

    @pl.when(t == 0)
    def _():
        out_ref[...] = jnp.zeros_like(out_ref)

    logits = cls_ref[...].astype(jnp.float32)          # (C, T)
    aux = aux_ref[...].astype(jnp.float32)             # (4, T)
    tgt_f = aux[0:1, :]                                # class target (as f32)
    sub_f = aux[1:2, :]                                # sub_map (0/1)
    occ_x = aux[2:3, :]                                # occupancy logits
    occ_y = aux[3:4, :]                                # occupancy target

    # In-kernel validity mask for the ragged tail (replaces the old `valid`
    # array that was streamed from HBM).
    lane = lax.broadcasted_iota(jnp.int32, (1, tile), 1)
    valid = (t * tile + lane) < hw                     # bool (1, T)
    valid_f = valid.astype(jnp.float32)

    tgt_i = tgt_f.astype(jnp.int32)                    # exact: small class ids

    # ----- focal loss, gathered at the target class ------------------------
    m = jnp.max(logits, axis=0, keepdims=True)         # (1, T)
    z = logits - m                                     # (C, T)
    e = jnp.exp(z)                                     # (C, T)  (only full-C EUP op)
    s = jnp.sum(e, axis=0, keepdims=True)              # (1, T)

    class_ids = lax.broadcasted_iota(jnp.int32, (num_classes, tile), 0)
    onehot = (class_ids == tgt_i).astype(jnp.float32)  # (C, T)
    z_t = jnp.sum(onehot * z, axis=0, keepdims=True)   # (1, T)
    e_t = jnp.sum(onehot * e, axis=0, keepdims=True)   # (1, T)

    p_t = e_t / s                                      # softmax prob at target
    log_p_t = z_t - jnp.log(s)                         # log-softmax at target
    om = 1.0 - p_t
    w = om * om if gamma == 2.0 else om ** gamma

    # Per-class alpha at the target class, built from Python scalar literals
    # (no captured array constants).  Same guard as the torch code; classes
    # beyond len(alphas) keep weight 1.0.
    a_t = jnp.ones((1, tile), jnp.float32)
    if int(alphas[0]) != 1:
        for i, a in enumerate(alphas):
            a_t = jnp.where(tgt_i == i, jnp.float32(a), a_t)

    focal_t = (-alpha) * a_t * w * log_p_t             # (1, T)

    sub_mask = jnp.logical_and(sub_f > 0.5, valid)
    focal_vec = jnp.where(sub_mask, focal_t, 0.0)      # where-select: padding
    sub_cnt = sub_mask.astype(jnp.float32)             # garbage cannot leak

    # ----- smooth-L1 on regression map, positive & active pixels only ------
    reg_mask = jnp.logical_and(tgt_i > 0, sub_mask)
    d = reg_p_ref[...].astype(jnp.float32) - reg_t_ref[...].astype(jnp.float32)
    ad = jnp.abs(d)
    sl1 = jnp.where(ad < 1.0, 0.5 * d * d, ad - 0.5)   # (R, T)
    sl1_sum = jnp.sum(sl1, axis=0, keepdims=True)      # (1, T)
    sl1_vec = jnp.where(reg_mask, sl1_sum, 0.0)
    reg_cnt = reg_mask.astype(jnp.float32)

    # ----- BCE with logits on occupancy map ---------------------------------
    bce = (jnp.maximum(occ_x, 0.0) - occ_x * occ_y
           + jnp.log1p(jnp.exp(-jnp.abs(occ_x))))
    bce_vec = jnp.where(valid, bce, 0.0)

    # Per-row accumulation (no concatenate, no wasted zero rows of math).
    out_ref[0:1, :] += focal_vec
    out_ref[1:2, :] += sub_cnt
    out_ref[2:3, :] += sl1_vec
    out_ref[3:4, :] += reg_cnt
    out_ref[4:5, :] += bce_vec
    out_ref[5:6, :] += valid_f


def aux_loss_pallas(cls_pred, reg_pred, occ_pred, cls_tgt, reg_tgt, sub_map,
                    occ_tgt, *, alpha=ALPHA, gamma=GAMMA, alphas=ALPHAS,
                    tile=2048):
    B, C, H, W = cls_pred.shape
    R = reg_pred.shape[1]
    HW = H * W

    # Lane-aligned tile, clamped to the (rounded-up) map size.
    tile = int(max(128, min(int(tile), pl.cdiv(HW, 128) * 128)))
    n_tiles = int(pl.cdiv(HW, tile))

    # Reshape-only layout (no transpose / pad HBM round trips).  The big maps
    # stay in their native dtype; the kernel upcasts to f32 internally.
    cls_f = cls_pred.reshape(B, C, HW)
    reg_p = reg_pred.reshape(B, R, HW)
    reg_t = reg_tgt.reshape(B, R, HW)

    # Pack the four single-row streams into one (B, 4, HW) slab -> one DMA
    # stream and full sublane density for the mask / BCE math.
    aux = jnp.stack(
        [cls_tgt.reshape(B, HW).astype(jnp.float32),
         sub_map.reshape(B, HW).astype(jnp.float32),
         occ_pred.reshape(B, HW).astype(jnp.float32),
         occ_tgt.reshape(B, HW).astype(jnp.float32)],
        axis=1)                                         # (B, 4, HW)

    kernel = functools.partial(
        _aux_loss_kernel, num_classes=C, gamma=float(gamma), alpha=float(alpha),
        alphas=tuple(float(a) for a in alphas), hw=HW, tile=tile)

    out = pl.pallas_call(
        kernel,
        out_shape=jax.ShapeDtypeStruct((B, 8, tile), jnp.float32),
        grid_spec=pltpu.PrefetchScalarGridSpec(
            num_scalar_prefetch=0,
            grid=(B, n_tiles),
            in_specs=[
                pl.BlockSpec((None, C, tile), lambda b, t: (b, 0, t)),  # cls logits
                pl.BlockSpec((None, R, tile), lambda b, t: (b, 0, t)),  # reg pred
                pl.BlockSpec((None, R, tile), lambda b, t: (b, 0, t)),  # reg target
                pl.BlockSpec((None, 4, tile), lambda b, t: (b, 0, t)),  # packed aux
            ],
            out_specs=pl.BlockSpec((None, 8, tile), lambda b, t: (b, 0, 0)),
        ),
        compiler_params=pltpu.CompilerParams(
            # batch axis is parallel (per-batch accumulator slab -> no race,
            # lets v7x's two TensorCores split it); pixel-tile axis is the
            # revisited-accumulator axis and must stay "arbitrary".
            dimension_semantics=("parallel", "arbitrary")),
    )(cls_f, reg_p, reg_t, aux)

    sums = jnp.sum(out, axis=(0, 2))                    # (8,)
    focal_sum, sub_cnt = sums[0], sums[1]
    sl1_sum, reg_cnt = sums[2], sums[3]
    bce_sum, n_elems = sums[4], sums[5]

    # NOTE: like the torch module, fc_loss is NaN if no pixel has sub_map==1
    # (mean over an empty gather).
    fc_loss = focal_sum / sub_cnt                       # mean over gathered pixels
    occ_loss = bce_sum / n_elems                        # mean over all occ elements
    num_pixels = reg_cnt * R                            # mask repeated over R channels
    loc_loss = jnp.where(num_pixels > 0,
                         sl1_sum / jnp.maximum(num_pixels, 1.0), 0.0)
    loss = jnp.where(num_pixels > 0,
                     2.0 * fc_loss + loc_loss + 0.1 * occ_loss, fc_loss)
    # .item() in torch returns python floats; here they are 0-d jnp scalars.
    return loss, fc_loss, loc_loss, occ_loss


def aux_loss_reference(cls_pred, reg_pred, occ_pred, cls_tgt, reg_tgt, sub_map,
                       occ_tgt):
    """Pure-JAX re-implementation of AuxLoss.forward (reduction='mean')."""
    C = cls_pred.shape[1]
    R = reg_pred.shape[1]
    sub = (sub_map == 1)
    num = jnp.sum(sub.astype(jnp.float32))

    sm = jax.nn.softmax(cls_pred, axis=1)
    lsm = jax.nn.log_softmax(cls_pred, axis=1)
    w = (1.0 - sm) * (1.0 - sm)
    focal = -ALPHA * w * lsm
    if int(ALPHAS[0]) != 1:
        focal = focal * jnp.asarray(ALPHAS, jnp.float32).reshape(1, C, 1, 1)
    onehot = jax.nn.one_hot(cls_tgt, C, axis=1, dtype=jnp.float32)
    loss_pix = jnp.sum(onehot * focal, axis=1)
    fc = jnp.sum(loss_pix * sub.astype(jnp.float32)) / num

    x = occ_pred.astype(jnp.float32)
    y = occ_tgt.astype(jnp.float32)
    bce = jnp.maximum(x, 0.0) - x * y + jnp.log1p(jnp.exp(-jnp.abs(x)))
    occ = jnp.mean(bce)

    mask = jnp.logical_and(cls_tgt > 0, sub)
    cnt = jnp.sum(mask.astype(jnp.float32))
    d = reg_pred - reg_tgt
    ad = jnp.abs(d)
    sl1 = jnp.where(ad < 1.0, 0.5 * d * d, ad - 0.5)
    sl1m = sl1 * mask[:, None, :, :].astype(jnp.float32)
    npx = cnt * R
    loc = jnp.where(npx > 0, jnp.sum(sl1m) / jnp.maximum(npx, 1.0), 0.0)
    loss = jnp.where(npx > 0, 2.0 * fc + loc + 0.1 * occ, fc)
    return loss, fc, loc, occ


if __name__ == "__main__":
    key = jax.random.PRNGKey(0)
    B, C, R, H, W = 2, 5, 6, 16, 16
    k1, k2, k3, k4, k5, k6, k7 = jax.random.split(key, 7)

    cls_pred = jax.random.normal(k1, (B, C, H, W), jnp.float32)
    reg_pred = jax.random.normal(k2, (B, R, H, W), jnp.float32)
    occ_pred = jax.random.normal(k3, (B, 1, H, W), jnp.float32)
    cls_tgt = jax.random.randint(k4, (B, H, W), 0, C, dtype=jnp.int32)
    reg_tgt = jax.random.normal(k5, (B, R, H, W), jnp.float32)
    sub_map = jax.random.bernoulli(k6, 0.5, (B, H, W)).astype(jnp.int32)
    occ_tgt = jax.random.bernoulli(k7, 0.4, (B, 1, H, W)).astype(jnp.float32)

    got = aux_loss_pallas(cls_pred, reg_pred, occ_pred, cls_tgt, reg_tgt,
                          sub_map, occ_tgt)
    jax.block_until_ready(got[0])

    ref = aux_loss_reference(cls_pred, reg_pred, occ_pred, cls_tgt, reg_tgt,
                             sub_map, occ_tgt)
    for a, b in zip(got, ref):
        np.testing.assert_allclose(np.asarray(a), np.asarray(b),
                                   rtol=2e-3, atol=1e-5)
    print("KERNEL_OK")
</pallas_src>

<mosaic_0001>
module attributes {stable_mosaic.version = 11 : i64} {
  func.func @_aux_loss_kernel(%arg0: i32, %arg1: i32, %arg2: memref<1x5x256xf32, #tpu.memory_space<vmem>>, %arg3: memref<1x6x256xf32, #tpu.memory_space<vmem>>, %arg4: memref<1x6x256xf32, #tpu.memory_space<vmem>>, %arg5: memref<1x4x256xf32, #tpu.memory_space<vmem>>, %arg6: memref<1x8x256xf32, #tpu.memory_space<vmem>>) attributes {dimension_semantics = [#tpu.dimension_semantics<parallel>, #tpu.dimension_semantics<arbitrary>], iteration_bounds = array<i64: 2, 1>, scalar_prefetch = 0 : i64, scratch_operands = 0 : i64, tpu.core_type = #tpu.core_type<tc>, window_params = [{transform_indices = @transform_0, window_bounds = array<i64: 1, 5, 256>}, {transform_indices = @transform_1, window_bounds = array<i64: 1, 6, 256>}, {transform_indices = @transform_2, window_bounds = array<i64: 1, 6, 256>}, {transform_indices = @transform_3, window_bounds = array<i64: 1, 4, 256>}, {transform_indices = @transform_4, window_bounds = array<i64: 1, 8, 256>}]} {
    %c0_i32 = arith.constant 0 : i32
    %0 = arith.cmpi eq, %arg1, %c0_i32 : i32
    %1 = arith.extui %0 : i1 to i32
    %c0_i32_0 = arith.constant 0 : i32
    %2 = arith.cmpi ne, %1, %c0_i32_0 : i32
    scf.if %2 {
      %cst_67 = arith.constant 0.000000e+00 : f32
      %147 = vector.broadcast %cst_67 : f32 to vector<8x256xf32>
      %c0_68 = arith.constant 0 : index
      %c0_69 = arith.constant 0 : index
      %c0_70 = arith.constant 0 : index
      %148 = vector.load %arg6[%c0_68, %c0_69, %c0_70] : memref<1x8x256xf32, #tpu.memory_space<vmem>>, vector<1x8x256xf32>
      %149 = vector.shape_cast %148 : vector<1x8x256xf32> to vector<8x256xf32>
      %150 = vector.shape_cast %147 : vector<8x256xf32> to vector<1x8x256xf32>
      tpu.vector_store %arg6[%c0_68, %c0_69, %c0_70], %150 {strides = array<i32>} : memref<1x8x256xf32, #tpu.memory_space<vmem>>, vector<1x8x256xf32>,
    } else {
    }
    %c0 = arith.constant 0 : index
    %c0_1 = arith.constant 0 : index
    %c0_2 = arith.constant 0 : index
    %3 = vector.load %arg2[%c0, %c0_1, %c0_2] : memref<1x5x256xf32, #tpu.memory_space<vmem>>, vector<1x5x256xf32>
    %4 = vector.shape_cast %3 : vector<1x5x256xf32> to vector<5x256xf32>
    %c0_3 = arith.constant 0 : index
    %c0_4 = arith.constant 0 : index
    %c0_5 = arith.constant 0 : index
    %5 = vector.load %arg5[%c0_3, %c0_4, %c0_5] : memref<1x4x256xf32, #tpu.memory_space<vmem>>, vector<1x4x256xf32>
    %6 = vector.shape_cast %5 : vector<1x4x256xf32> to vector<4x256xf32>
    %7 = vector.extract_strided_slice %6 {offsets = [0, 0], sizes = [1, 256], strides = [1, 1]} : vector<4x256xf32> to vector<1x256xf32>
    %8 = vector.extract_strided_slice %6 {offsets = [1, 0], sizes = [1, 256], strides = [1, 1]} : vector<4x256xf32> to vector<1x256xf32>
    %9 = vector.extract_strided_slice %6 {offsets = [2, 0], sizes = [1, 256], strides = [1, 1]} : vector<4x256xf32> to vector<1x256xf32>
    %10 = vector.extract_strided_slice %6 {offsets = [3, 0], sizes = [1, 256], strides = [1, 1]} : vector<4x256xf32> to vector<1x256xf32>
    %11 = tpu.iota {dimensions = array<i32: 1>} : vector<1x256xi32>
    %c256_i32 = arith.constant 256 : i32
    %12 = arith.muli %arg1, %c256_i32 : i32
    %13 = vector.broadcast %12 : i32 to vector<1x256xi32>
    %14 = arith.addi %13, %11 : vector<1x256xi32>
    %c256_i32_6 = arith.constant 256 : i32
    %15 = vector.broadcast %c256_i32_6 : i32 to vector<1x256xi32>
    %16 = arith.cmpi slt, %14, %15 : vector<1x256xi32>
    %17 = arith.extui %16 : vector<1x256xi1> to vector<1x256xi32>
    %18 = arith.sitofp %17 : vector<1x256xi32> to vector<1x256xf32>
    %19 = arith.fptosi %7 : vector<1x256xf32> to vector<1x256xi32>
    %cst = arith.constant dense<0xFF800000> : vector<256xf32>
    %20 = vector.multi_reduction <maximumf>, %4, %cst [0] : vector<5x256xf32> to vector<256xf32>
    %21 = vector.shape_cast %20 : vector<256xf32> to vector<1x256xf32>
    %22 = vector.broadcast %21 : vector<1x256xf32> to vector<5x256xf32>
    %23 = arith.subf %4, %22 : vector<5x256xf32>
    %24 = math.exp %23 : vector<5x256xf32>
    %cst_7 = arith.constant dense<0.000000e+00> : vector<256xf32>
    %25 = vector.multi_reduction <add>, %24, %cst_7 [0] : vector<5x256xf32> to vector<256xf32>
    %26 = vector.shape_cast %25 : vector<256xf32> to vector<1x256xf32>
    %27 = tpu.iota {dimensions = array<i32: 0>} : vector<5x256xi32>
    %28 = vector.broadcast %19 : vector<1x256xi32> to vector<5x256xi32>
    %29 = arith.cmpi eq, %27, %28 : vector<5x256xi32>
    %30 = arith.extui %29 : vector<5x256xi1> to vector<5x256xi32>
    %31 = arith.sitofp %30 : vector<5x256xi32> to vector<5x256xf32>
    %32 = arith.mulf %31, %23 : vector<5x256xf32>
    %cst_8 = arith.constant dense<0.000000e+00> : vector<256xf32>
    %33 = vector.multi_reduction <add>, %32, %cst_8 [0] : vector<5x256xf32> to vector<256xf32>
    %34 = vector.shape_cast %33 : vector<256xf32> to vector<1x256xf32>
    %35 = arith.mulf %31, %24 : vector<5x256xf32>
    %cst_9 = arith.constant dense<0.000000e+00> : vector<256xf32>
    %36 = vector.multi_reduction <add>, %35, %cst_9 [0] : vector<5x256xf32> to vector<256xf32>
    %37 = vector.shape_cast %36 : vector<256xf32> to vector<1x256xf32>
    %38 = arith.divf %37, %26 : vector<1x256xf32>
    %39 = math.log %26 : vector<1x256xf32>
    %40 = arith.subf %34, %39 : vector<1x256xf32>
    %cst_10 = arith.constant 1.000000e+00 : f32
    %41 = vector.broadcast %cst_10 : f32 to vector<1x256xf32>
    %42 = arith.subf %41, %38 : vector<1x256xf32>
    %43 = arith.mulf %42, %42 : vector<1x256xf32>
    %cst_11 = arith.constant 1.000000e+00 : f32
    %44 = vector.broadcast %cst_11 : f32 to vector<1x256xf32>
    %c0_i32_12 = arith.constant 0 : i32
    %45 = vector.broadcast %c0_i32_12 : i32 to vector<1x256xi32>
    %46 = arith.cmpi eq, %19, %45 : vector<1x256xi32>
    %cst_13 = arith.constant 1.000000e-01 : f32
    %47 = vector.broadcast %cst_13 : f32 to vector<1x256xf32>
    %48 = arith.select %46, %47, %44 : vector<1x256xi1>, vector<1x256xf32>
    %c1_i32 = arith.constant 1 : i32
    %49 = vector.broadcast %c1_i32 : i32 to vector<1x256xi32>
    %50 = arith.cmpi eq, %19, %49 : vector<1x256xi32>
    %cst_14 = arith.constant 2.000000e-01 : f32
    %51 = vector.broadcast %cst_14 : f32 to vector<1x256xf32>
    %52 = arith.select %50, %51, %48 : vector<1x256xi1>, vector<1x256xf32>
    %c2_i32 = arith.constant 2 : i32
    %53 = vector.broadcast %c2_i32 : i32 to vector<1x256xi32>
    %54 = arith.cmpi eq, %19, %53 : vector<1x256xi32>
    %cst_15 = arith.constant 1.000000e+00 : f32
    %55 = vector.broadcast %cst_15 : f32 to vector<1x256xf32>
    %56 = arith.select %54, %55, %52 : vector<1x256xi1>, vector<1x256xf32>
    %c3_i32 = arith.constant 3 : i32
    %57 = vector.broadcast %c3_i32 : i32 to vector<1x256xi32>
    %58 = arith.cmpi eq, %19, %57 : vector<1x256xi32>
    %cst_16 = arith.constant 3.000000e-01 : f32
    %59 = vector.broadcast %cst_16 : f32 to vector<1x256xf32>
    %60 = arith.select %58, %59, %56 : vector<1x256xi1>, vector<1x256xf32>
    %c4_i32 = arith.constant 4 : i32
    %61 = vector.broadcast %c4_i32 : i32 to vector<1x256xi32>
    %62 = arith.cmpi eq, %19, %61 : vector<1x256xi32>
    %cst_17 = arith.constant 2.000000e-01 : f32
    %63 = vector.broadcast %cst_17 : f32 to vector<1x256xf32>
    %64 = arith.select %62, %63, %60 : vector<1x256xi1>, vector<1x256xf32>
    %cst_18 = arith.constant -2.500000e-01 : f32
    %65 = vector.broadcast %cst_18 : f32 to vector<1x256xf32>
    %66 = arith.mulf %65, %64 : vector<1x256xf32>
    %67 = arith.mulf %66, %43 : vector<1x256xf32>
    %68 = arith.mulf %67, %40 : vector<1x256xf32>
    %cst_19 = arith.constant 5.000000e-01 : f32
    %69 = vector.broadcast %cst_19 : f32 to vector<1x256xf32>
    %70 = arith.cmpf ogt, %8, %69 : vector<1x256xf32>
    %71 = arith.andi %70, %16 : vector<1x256xi1>
    %cst_20 = arith.constant 0.000000e+00 : f32
    %72 = vector.broadcast %cst_20 : f32 to vector<1x256xf32>
    %73 = arith.select %71, %68, %72 : vector<1x256xi1>, vector<1x256xf32>
    %74 = arith.extui %71 : vector<1x256xi1> to vector<1x256xi32>
    %75 = arith.sitofp %74 : vector<1x256xi32> to vector<1x256xf32>
    %c0_i32_21 = arith.constant 0 : i32
    %76 = vector.broadcast %c0_i32_21 : i32 to vector<1x256xi32>
    %77 = arith.cmpi sgt, %19, %76 : vector<1x256xi32>
    %78 = arith.andi %77, %71 : vector<1x256xi1>
    %c0_22 = arith.constant 0 : index
    %c0_23 = arith.constant 0 : index
    %c0_24 = arith.constant 0 : index
    %79 = vector.load %arg3[%c0_22, %c0_23, %c0_24] : memref<1x6x256xf32, #tpu.memory_space<vmem>>, vector<1x6x256xf32>
    %80 = vector.shape_cast %79 : vector<1x6x256xf32> to vector<6x256xf32>
    %c0_25 = arith.constant 0 : index
    %c0_26 = arith.constant 0 : index
    %c0_27 = arith.constant 0 : index
    %81 = vector.load %arg4[%c0_25, %c0_26, %c0_27] : memref<1x6x256xf32, #tpu.memory_space<vmem>>, vector<1x6x256xf32>
    %82 = vector.shape_cast %81 : vector<1x6x256xf32> to vector<6x256xf32>
    %83 = arith.subf %80, %82 : vector<6x256xf32>
    %84 = math.absf %83 : vector<6x256xf32>
    %cst_28 = arith.constant 1.000000e+00 : f32
    %85 = vector.broadcast %cst_28 : f32 to vector<6x256xf32>
    %86 = arith.cmpf olt, %84, %85 : vector<6x256xf32>
    %cst_29 = arith.constant 5.000000e-01 : f32
    %87 = vector.broadcast %cst_29 : f32 to vector<6x256xf32>
    %88 = arith.mulf %87, %83 : vector<6x256xf32>
    %89 = arith.mulf %88, %83 : vector<6x256xf32>
    %cst_30 = arith.constant 5.000000e-01 : f32
    %90 = vector.broadcast %cst_30 : f32 to vector<6x256xf32>
    %91 = arith.subf %84, %90 : vector<6x256xf32>
    %92 = arith.select %86, %89, %91 : vector<6x256xi1>, vector<6x256xf32>
    %cst_31 = arith.constant dense<0.000000e+00> : vector<256xf32>
    %93 = vector.multi_reduction <add>, %92, %cst_31 [0] : vector<6x256xf32> to vector<256xf32>
    %94 = vector.shape_cast %93 : vector<256xf32> to vector<1x256xf32>
    %cst_32 = arith.constant 0.000000e+00 : f32
    %95 = vector.broadcast %cst_32 : f32 to vector<1x256xf32>
    %96 = arith.select %78, %94, %95 : vector<1x256xi1>, vector<1x256xf32>
    %97 = arith.extui %78 : vector<1x256xi1> to vector<1x256xi32>
    %98 = arith.sitofp %97 : vector<1x256xi32> to vector<1x256xf32>
    %cst_33 = arith.constant 0.000000e+00 : f32
    %99 = vector.broadcast %cst_33 : f32 to vector<1x256xf32>
    %100 = arith.maximumf %9, %99 : vector<1x256xf32>
    %101 = arith.mulf %9, %10 : vector<1x256xf32>
    %102 = arith.subf %100, %101 : vector<1x256xf32>
    %103 = math.absf %9 : vector<1x256xf32>
    %cst_34 = arith.constant 0.000000e+00 : f32
    %104 = vector.broadcast %cst_34 : f32 to vector<1x256xf32>
    %105 = arith.subf %104, %103 : vector<1x256xf32>
    %106 = math.exp %105 : vector<1x256xf32>
    %107 = math.log1p %106 : vector<1x256xf32>
    %108 = arith.addf %102, %107 : vector<1x256xf32>
    %cst_35 = arith.constant 0.000000e+00 : f32
    %109 = vector.broadcast %cst_35 : f32 to vector<1x256xf32>
    %110 = arith.select %16, %108, %109 : vector<1x256xi1>, vector<1x256xf32>
    %c0_36 = arith.constant 0 : index
    %c0_37 = arith.constant 0 : index
    %c0_38 = arith.constant 0 : index
    %111 = vector.load %arg6[%c0_36, %c0_37, %c0_38] : memref<1x8x256xf32, #tpu.memory_space<vmem>>, vector<1x1x256xf32>
    %112 = vector.shape_cast %111 : vector<1x1x256xf32> to vector<1x256xf32>
    %113 = arith.addf %112, %73 : vector<1x256xf32>
    %c0_39 = arith.constant 0 : index
    %c0_40 = arith.constant 0 : index
    %c0_41 = arith.constant 0 : index
    %114 = vector.load %arg6[%c0_39, %c0_40, %c0_41] : memref<1x8x256xf32, #tpu.memory_space<vmem>>, vector<1x1x256xf32>
    %115 = vector.shape_cast %114 : vector<1x1x256xf32> to vector<1x256xf32>
    %116 = vector.shape_cast %113 : vector<1x256xf32> to vector<1x1x256xf32>
    tpu.vector_store %arg6[%c0_39, %c0_40, %c0_41], %116 {strides = array<i32>} : memref<1x8x256xf32, #tpu.memory_space<vmem>>, vector<1x1x256xf32>,
    %c0_42 = arith.constant 0 : index
    %c1 = arith.constant 1 : index
    %c0_43 = arith.constant 0 : index
    %117 = vector.load %arg6[%c0_42, %c1, %c0_43] : memref<1x8x256xf32, #tpu.memory_space<vmem>>, vector<1x1x256xf32>
    %118 = vector.shape_cast %117 : vector<1x1x256xf32> to vector<1x256xf32>
    %119 = arith.addf %118, %75 : vector<1x256xf32>
    %c0_44 = arith.constant 0 : index
    %c1_45 = arith.constant 1 : index
    %c0_46 = arith.constant 0 : index
    %120 = vector.load %arg6[%c0_44, %c1_45, %c0_46] : memref<1x8x256xf32, #tpu.memory_space<vmem>>, vector<1x1x256xf32>
    %121 = vector.shape_cast %120 : vector<1x1x256xf32> to vector<1x256xf32>
    %122 = vector.shape_cast %119 : vector<1x256xf32> to vector<1x1x256xf32>
    tpu.vector_store %arg6[%c0_44, %c1_45, %c0_46], %122 {strides = array<i32>} : memref<1x8x256xf32, #tpu.memory_space<vmem>>, vector<1x1x256xf32>,
    %c0_47 = arith.constant 0 : index
    %c2 = arith.constant 2 : index
    %c0_48 = arith.constant 0 : index
    %123 = vector.load %arg6[%c0_47, %c2, %c0_48] : memref<1x8x256xf32, #tpu.memory_space<vmem>>, vector<1x1x256xf32>
    %124 = vector.shape_cast %123 : vector<1x1x256xf32> to vector<1x256xf32>
    %125 = arith.addf %124, %96 : vector<1x256xf32>
    %c0_49 = arith.constant 0 : index
    %c2_50 = arith.constant 2 : index
    %c0_51 = arith.constant 0 : index
    %126 = vector.load %arg6[%c0_49, %c2_50, %c0_51] : memref<1x8x256xf32, #tpu.memory_space<vmem>>, vector<1x1x256xf32>
    %127 = vector.shape_cast %126 : vector<1x1x256xf32> to vector<1x256xf32>
    %128 = vector.shape_cast %125 : vector<1x256xf32> to vector<1x1x256xf32>
    tpu.vector_store %arg6[%c0_49, %c2_50, %c0_51], %128 {strides = array<i32>} : memref<1x8x256xf32, #tpu.memory_space<vmem>>, vector<1x1x256xf32>,
    %c0_52 = arith.constant 0 : index
    %c3 = arith.constant 3 : index
    %c0_53 = arith.constant 0 : index
    %129 = vector.load %arg6[%c0_52, %c3, %c0_53] : memref<1x8x256xf32, #tpu.memory_space<vmem>>, vector<1x1x256xf32>
    %130 = vector.shape_cast %129 : vector<1x1x256xf32> to vector<1x256xf32>
    %131 = arith.addf %130, %98 : vector<1x256xf32>
    %c0_54 = arith.constant 0 : index
    %c3_55 = arith.constant 3 : index
    %c0_56 = arith.constant 0 : index
    %132 = vector.load %arg6[%c0_54, %c3_55, %c0_56] : memref<1x8x256xf32, #tpu.memory_space<vmem>>, vector<1x1x256xf32>
    %133 = vector.shape_cast %132 : vector<1x1x256xf32> to vector<1x256xf32>
    %134 = vector.shape_cast %131 : vector<1x256xf32> to vector<1x1x256xf32>
    tpu.vector_store %arg6[%c0_54, %c3_55, %c0_56], %134 {strides = array<i32>} : memref<1x8x256xf32, #tpu.memory_space<vmem>>, vector<1x1x256xf32>,
    %c0_57 = arith.constant 0 : index
    %c4 = arith.constant 4 : index
    %c0_58 = arith.constant 0 : index
    %135 = vector.load %arg6[%c0_57, %c4, %c0_58] : memref<1x8x256xf32, #tpu.memory_space<vmem>>, vector<1x1x256xf32>
    %136 = vector.shape_cast %135 : vector<1x1x256xf32> to vector<1x256xf32>
    %137 = arith.addf %136, %110 : vector<1x256xf32>
    %c0_59 = arith.constant 0 : index
    %c4_60 = arith.constant 4 : index
    %c0_61 = arith.constant 0 : index
    %138 = vector.load %arg6[%c0_59, %c4_60, %c0_61] : memref<1x8x256xf32, #tpu.memory_space<vmem>>, vector<1x1x256xf32>
    %139 = vector.shape_cast %138 : vector<1x1x256xf32> to vector<1x256xf32>
    %140 = vector.shape_cast %137 : vector<1x256xf32> to vector<1x1x256xf32>
    tpu.vector_store %arg6[%c0_59, %c4_60, %c0_61], %140 {strides = array<i32>} : memref<1x8x256xf32, #tpu.memory_space<vmem>>, vector<1x1x256xf32>,
    %c0_62 = arith.constant 0 : index
    %c5 = arith.constant 5 : index
    %c0_63 = arith.constant 0 : index
    %141 = vector.load %arg6[%c0_62, %c5, %c0_63] : memref<1x8x256xf32, #tpu.memory_space<vmem>>, vector<1x1x256xf32>
    %142 = vector.shape_cast %141 : vector<1x1x256xf32> to vector<1x256xf32>
    %143 = arith.addf %142, %18 : vector<1x256xf32>
    %c0_64 = arith.constant 0 : index
    %c5_65 = arith.constant 5 : index
    %c0_66 = arith.constant 0 : index
    %144 = vector.load %arg6[%c0_64, %c5_65, %c0_66] : memref<1x8x256xf32, #tpu.memory_space<vmem>>, vector<1x1x256xf32>
    %145 = vector.shape_cast %144 : vector<1x1x256xf32> to vector<1x256xf32>
    %146 = vector.shape_cast %143 : vector<1x256xf32> to vector<1x1x256xf32>
    tpu.vector_store %arg6[%c0_64, %c5_65, %c0_66], %146 {strides = array<i32>} : memref<1x8x256xf32, #tpu.memory_space<vmem>>, vector<1x1x256xf32>,
    return
  }
  func.func @transform_0(%arg0: i32, %arg1: i32) -> (i32, i32, i32) {
    %c0_i32 = arith.constant 0 : i32
    %c0_i32_0 = arith.constant 0 : i32
    return %arg0, %c0_i32, %arg1 : i32, i32, i32
  }
  func.func @transform_1(%arg0: i32, %arg1: i32) -> (i32, i32, i32) {
    %c0_i32 = arith.constant 0 : i32
    %c0_i32_0 = arith.constant 0 : i32
    return %arg0, %c0_i32, %arg1 : i32, i32, i32
  }
  func.func @transform_2(%arg0: i32, %arg1: i32) -> (i32, i32, i32) {
    %c0_i32 = arith.constant 0 : i32
    %c0_i32_0 = arith.constant 0 : i32
    return %arg0, %c0_i32, %arg1 : i32, i32, i32
  }
  func.func @transform_3(%arg0: i32, %arg1: i32) -> (i32, i32, i32) {
    %c0_i32 = arith.constant 0 : i32
    %c0_i32_0 = arith.constant 0 : i32
    return %arg0, %c0_i32, %arg1 : i32, i32, i32
  }
  func.func @transform_4(%arg0: i32, %arg1: i32) -> (i32, i32, i32) {
    %c0_i32 = arith.constant 0 : i32
    %c0_i32_0 = arith.constant 0 : i32
    %c0_i32_1 = arith.constant 0 : i32
    return %arg0, %c0_i32, %c0_i32_0 : i32, i32, i32
  }
}

</mosaic_0001>

<llo_original>
// kernel: tpu_custom_call.1
$region0: #{tpu_custom_call.1}
  #allocation0 [shape = 'u32[]', space=smem, size = 0x4, offset = 0x4, fixed_abs, tag = 'smem constant byte address 0x4 - core index']
  #allocation1 [shape = 'u32[144,128]{1,0:T(1,128)}', space=vmem, size = 0x12000, scoped, tag = 'internal scratch']
  %s0 = inlined_call_operand.vmem [shape: f32[2,5,256], index: 0, kind: input, shape index: {}]
  %s1 = inlined_call_operand.vmem [shape: f32[2,6,256], index: 1, kind: input, shape index: {}]
  %s2 = inlined_call_operand.vmem [shape: f32[2,6,256], index: 2, kind: input, shape index: {}]
  %s3 = inlined_call_operand.vmem [shape: f32[2,4,256], index: 3, kind: input, shape index: {}]
  %s4 = inlined_call_operand.hbm [shape: f32[2,8,256], index: 4, kind: output, shape index: {}]
  %s5 = sld [smem:[#allocation0]]
  $region53: #{tpu_custom_call.1} parent=0
    _
  %s7 = ssub.s32 1, %s5
  %s8 = scalar_select 0, %s7, %s5
  $region1: #{tpu_custom_call.1} parent=0
    #allocation2 [shape = 'u8[16384]{0}', space=vmem, size = 0x4000, scoped, tag = 'output window, operand 0']
    #allocation3 [shape = 's32[2]{0}', space=sflag, size = 0x8, scoped, tag = 'scoped memory for tpu_custom_call.1']
    %9 = vsyncpa [#allocation3], 0
    %s10 = scalar_lea.sflag [#allocation3], 1
    %11 = vsyncpa %s10, 0
    loop: start=0, step=1, limit=4
    $region2: #{tpu_custom_call.1} parent=1 // loop_pre_header
      _
    $region3: #{tpu_custom_call.1} parent=1 // loop_header
      %s13 = sphi 0, %s17
      %p14 = scmp.ge.s32.totalorder %s13, 4
      %s20 = sphi 0, %s32
      %s21 = sphi 0, %s28
      %s22 = sphi 0, %s20
      %s23 = sphi 0, %s21
      %s24 = sphi 0, %s22
      %s25 = sphi 0, %s23
      %s37 = sphi 0, %s39
      %s40 = sphi 0, %s37
      %s41 = sphi 0, %s40
      %s57 = sphi 0, %s41
      %s65 = sphi 0, %s67
      %s68 = sphi 0, %s65
      %s69 = sphi 0, %s68
      %s85 = sphi 0, %s69
      %s93 = sphi 0, %s95
      %s96 = sphi 0, %s93
      %s97 = sphi 0, %s96
      %s113 = sphi 0, %s97
      %s121 = sphi 0, %s123
      %s124 = sphi 0, %s121
      %s125 = sphi 0, %s124
      %s141 = sphi 0, %s125
      %s147 = sphi 0, %s149
      %s150 = sphi 0, %s147
      %s151 = sphi 0, %s150
      %s167 = sphi 0, %s151
    $region4: #{tpu_custom_call.1} parent=1 // loop_header_branch
      %16 = sbr.rel (%p14) target = $region8
    $region5: #{tpu_custom_call.1} parent=1 // loop_body
      %s18 = ssub.s32 %s13, 1
      %s19 = ssub.s32 %s13, 2
      %s26 = sadd.s32 1, %s21
      %p27 = scmp.ge.s32.totalorder %s26, 1
      %s28 = scalar_select %p27, 0, %s26
      %s29 = sadd.s32 1, %s20
      %s30 = scalar_select %p27, %s29, %s20
      %p31 = scmp.ge.s32.totalorder %s30, 2
      %s32 = scalar_select %p31, 0, %s30
      %s33 = ssub.s32 %s20, %s32
      %s34 = ssub.s32 %s21, %s28
      %s35 = sor.u32 %s33, %s34
      %p36 = scmp.eq.s32.totalorder %s35, 0
      %s38 = sadd.s32 %s37, 1
      %s39 = scalar_select %p36, %s37, %s38
      %p42 = pneg %p36
      %p43 = scmp.eq.s32.totalorder %s13, 1
      %p44 = por %p42, %p43
      %p45 = scmp.ne.s32.totalorder %s37, %s40
      %p46 = scmp.eq.s32.totalorder %s13, 0
      %p47 = por %p45, %p46
      %p48 = scmp.ne.s32.totalorder %s37, %s40
      %p49 = scmp.eq.s32.totalorder %s18, 1
      %p50 = por %p48, %p49
      %p51 = scmp.ne.s32.totalorder %s40, %s41
      %p52 = scmp.eq.s32.totalorder %s18, 0
      %p53 = por %p51, %p52
      %p54 = scmp.ne.s32.totalorder %s40, %s41
      %p55 = scmp.eq.s32.totalorder %s19, 1
      %p56 = por %p54, %p55
      %p58 = scmp.ne.s32.totalorder %s41, %s57
      %p59 = scmp.eq.s32.totalorder %s19, 0
      %p60 = por %p58, %p59
      %s61 = ssub.s32 %s20, %s32
      %s62 = ssub.s32 %s21, %s28
      %s63 = sor.u32 %s61, %s62
      %p64 = scmp.eq.s32.totalorder %s63, 0
      %s66 = sadd.s32 %s65, 1
      %s67 = scalar_select %p64, %s65, %s66
      %p70 = pneg %p64
      %p71 = scmp.eq.s32.totalorder %s13, 1
      %p72 = por %p70, %p71
      %p73 = scmp.ne.s32.totalorder %s65, %s68
      %p74 = scmp.eq.s32.totalorder %s13, 0
      %p75 = por %p73, %p74
      %p76 = scmp.ne.s32.totalorder %s65, %s68
      %p77 = scmp.eq.s32.totalorder %s18, 1
      %p78 = por %p76, %p77
      %p79 = scmp.ne.s32.totalorder %s68, %s69
      %p80 = scmp.eq.s32.totalorder %s18, 0
      %p81 = por %p79, %p80
      %p82 = scmp.ne.s32.totalorder %s68, %s69
      %p83 = scmp.eq.s32.totalorder %s19, 1
      %p84 = por %p82, %p83
      %p86 = scmp.ne.s32.totalorder %s69, %s85
      %p87 = scmp.eq.s32.totalorder %s19, 0
      %p88 = por %p86, %p87
      %s89 = ssub.s32 %s20, %s32
      %s90 = ssub.s32 %s21, %s28
      %s91 = sor.u32 %s89, %s90
      %p92 = scmp.eq.s32.totalorder %s91, 0
      %s94 = sadd.s32 %s93, 1
      %s95 = scalar_select %p92, %s93, %s94
      %p98 = pneg %p92
      %p99 = scmp.eq.s32.totalorder %s13, 1
      %p100 = por %p98, %p99
      %p101 = scmp.ne.s32.totalorder %s93, %s96
      %p102 = scmp.eq.s32.totalorder %s13, 0
      %p103 = por %p101, %p102
      %p104 = scmp.ne.s32.totalorder %s93, %s96
      %p105 = scmp.eq.s32.totalorder %s18, 1
      %p106 = por %p104, %p105
      %p107 = scmp.ne.s32.totalorder %s96, %s97
      %p108 = scmp.eq.s32.totalorder %s18, 0
      %p109 = por %p107, %p108
      %p110 = scmp.ne.s32.totalorder %s96, %s97
      %p111 = scmp.eq.s32.totalorder %s19, 1
      %p112 = por %p110, %p111
      %p114 = scmp.ne.s32.totalorder %s97, %s113
      %p115 = scmp.eq.s32.totalorder %s19, 0
      %p116 = por %p114, %p115
      %s117 = ssub.s32 %s20, %s32
      %s118 = ssub.s32 %s21, %s28
      %s119 = sor.u32 %s117, %s118
      %p120 = scmp.eq.s32.totalorder %s119, 0
      %s122 = sadd.s32 %s121, 1
      %s123 = scalar_select %p120, %s121, %s122
      %p126 = pneg %p120
      %p127 = scmp.eq.s32.totalorder %s13, 1
      %p128 = por %p126, %p127
      %p129 = scmp.ne.s32.totalorder %s121, %s124
      %p130 = scmp.eq.s32.totalorder %s13, 0
      %p131 = por %p129, %p130
      %p132 = scmp.ne.s32.totalorder %s121, %s124
      %p133 = scmp.eq.s32.totalorder %s18, 1
      %p134 = por %p132, %p133
      %p135 = scmp.ne.s32.totalorder %s124, %s125
      %p136 = scmp.eq.s32.totalorder %s18, 0
      %p137 = por %p135, %p136
      %p138 = scmp.ne.s32.totalorder %s124, %s125
      %p139 = scmp.eq.s32.totalorder %s19, 1
      %p140 = por %p138, %p139
      %p142 = scmp.ne.s32.totalorder %s125, %s141
      %p143 = scmp.eq.s32.totalorder %s19, 0
      %p144 = por %p142, %p143
      %s145 = ssub.s32 %s20, %s32
      %p146 = scmp.eq.s32.totalorder %s145, 0
      %s148 = sadd.s32 %s147, 1
      %s149 = scalar_select %p146, %s147, %s148
      %p152 = pneg %p146
      %p153 = scmp.eq.s32.totalorder %s13, 1
      %p154 = por %p152, %p153
      %p155 = scmp.ne.s32.totalorder %s147, %s150
      %p156 = scmp.eq.s32.totalorder %s13, 0
      %p157 = por %p155, %p156
      %p158 = scmp.ne.s32.totalorder %s147, %s150
      %p159 = scmp.eq.s32.totalorder %s18, 1
      %p160 = por %p158, %p159
      %p161 = scmp.ne.s32.totalorder %s150, %s151
      %p162 = scmp.eq.s32.totalorder %s18, 0
      %p163 = por %p161, %p162
      %p164 = scmp.ne.s32.totalorder %s150, %s151
      %p165 = scmp.eq.s32.totalorder %s19, 1
      %p166 = por %p164, %p165
      %p168 = scmp.ne.s32.totalorder %s151, %s167
      %p169 = scmp.eq.s32.totalorder %s19, 0
      %p170 = por %p168, %p169
      %p171 = scmp.le.s32.totalorder 1, %s13
      %p172 = scmp.lt.s32.totalorder %s13, 3
      %p173 = pnand %p171, %p172
      %p174 = pneg %p173
      // Predicated region
      $region9: #{tpu_custom_call.1} parent=5 // pred_check
        _
      $region10: #{tpu_custom_call.1} parent=5 // pred_check_branch
        %176 = sbr.rel (%p173) target = $region12
      $region11: #{tpu_custom_call.1} parent=5 // pred_region
        %s177 = ssub.s32 %s13, 1
      $region12: #{tpu_custom_call.1} parent=5 // pred_fallthru
        _
      %p178 = scmp.lt.s32.totalorder %s13, 2
      // Predicated region
      $region13: #{tpu_custom_call.1} parent=5 // pred_check
        %p179 = pneg %p178
      $region14: #{tpu_custom_call.1} parent=5 // pred_check_branch
        %181 = sbr.rel (%p179) target = $region16
      $region15: #{tpu_custom_call.1} parent=5 // pred_region
        // Predicated region
        $region17: #{tpu_custom_call.1} parent=15 // pred_check
          %p182 = pneg %p47
        $region18: #{tpu_custom_call.1} parent=15 // pred_check_branch
          %184 = sbr.rel (%p182) target = $region20
        $region19: #{tpu_custom_call.1} parent=15 // pred_region
          %s185 = smul.u32 2, %s21
          %p186 = scmp.lt.s32.totalorder %s20, 1
          %s187 = scalar_select %p186, %s20, 1
          %p188 = scmp.lt.s32.totalorder %s185, 1
          %s189 = scalar_select %p188, %s185, 1
          %s190 = smul.addr %s187, 2
          %s191 = sadd.s32 %s189, %s190
          %s192 = smul.addr %s191, 8
          %s193 = scalar_lea.vmem %s0, %s192
          %s194 = smul.u32 2, %s21
        $region20: #{tpu_custom_call.1} parent=15 // pred_fallthru
          _
        // Predicated region
        $region21: #{tpu_custom_call.1} parent=15 // pred_check
          %p195 = pneg %p75
        $region22: #{tpu_custom_call.1} parent=15 // pred_check_branch
          %197 = sbr.rel (%p195) target = $region24
        $region23: #{tpu_custom_call.1} parent=15 // pred_region
          %s198 = smul.u32 2, %s21
          %p199 = scmp.lt.s32.totalorder %s20, 1
          %s200 = scalar_select %p199, %s20, 1
          %p201 = scmp.lt.s32.totalorder %s198, 1
          %s202 = scalar_select %p201, %s198, 1
          %s203 = smul.addr %s200, 2
          %s204 = sadd.s32 %s202, %s203
          %s205 = smul.addr %s204, 8
          %s206 = scalar_lea.vmem %s1, %s205
          %s207 = smul.u32 2, %s21
        $region24: #{tpu_custom_call.1} parent=15 // pred_fallthru
          _
        // Predicated region
        $region25: #{tpu_custom_call.1} parent=15 // pred_check
          %p208 = pneg %p103
        $region26: #{tpu_custom_call.1} parent=15 // pred_check_branch
          %210 = sbr.rel (%p208) target = $region28
        $region27: #{tpu_custom_call.1} parent=15 // pred_region
          %s211 = smul.u32 2, %s21
          %p212 = scmp.lt.s32.totalorder %s20, 1
          %s213 = scalar_select %p212, %s20, 1
          %p214 = scmp.lt.s32.totalorder %s211, 1
          %s215 = scalar_select %p214, %s211, 1
          %s216 = smul.addr %s213, 2
          %s217 = sadd.s32 %s215, %s216
          %s218 = smul.addr %s217, 8
          %s219 = scalar_lea.vmem %s2, %s218
          %s220 = smul.u32 2, %s21
        $region28: #{tpu_custom_call.1} parent=15 // pred_fallthru
          _
        // Predicated region
        $region29: #{tpu_custom_call.1} parent=15 // pred_check
          %p221 = pneg %p131
        $region30: #{tpu_custom_call.1} parent=15 // pred_check_branch
          %223 = sbr.rel (%p221) target = $region32
        $region31: #{tpu_custom_call.1} parent=15 // pred_region
          %s224 = smul.u32 2, %s21
          %p225 = scmp.lt.s32.totalorder %s20, 1
          %s226 = scalar_select %p225, %s20, 1
          %p227 = scmp.lt.s32.totalorder %s224, 1
          %s228 = scalar_select %p227, %s224, 1
          %s229 = smul.addr %s226, 2
          %s230 = sadd.s32 %s228, %s229
          %s231 = smul.addr %s230, 4
          %s232 = scalar_lea.vmem %s3, %s231
          %s233 = smul.u32 2, %s21
        $region32: #{tpu_custom_call.1} parent=15 // pred_fallthru
          _
      $region16: #{tpu_custom_call.1} parent=5 // pred_fallthru
        _
      %p234 = scmp.le.s32.totalorder 1, %s13
      %p235 = scmp.lt.s32.totalorder %s13, 3
      %p236 = pnand %p234, %p235
      %p237 = pneg %p236
      // Predicated region
      $region33: #{tpu_custom_call.1} parent=5 // pred_check
        _
      $region34: #{tpu_custom_call.1} parent=5 // pred_check_branch
        %239 = sbr.rel (%p236) target = $region36
      $region35: #{tpu_custom_call.1} parent=5 // pred_region
        %s240 = ssub.s32 %s13, 1
        %s241 = smul.u32 2, %s23
        %p242 = scmp.lt.s32.totalorder %s22, 1
        %s243 = scalar_select %p242, %s22, 1
        %p244 = scmp.lt.s32.totalorder %s241, 1
        %s245 = scalar_select %p244, %s241, 1
        %s246 = smul.addr %s243, 2
        %s247 = sadd.s32 %s245, %s246
        %s248 = smul.addr %s247, 8
        %s249 = scalar_lea.vmem %s0, %s248
        %p250 = pneg %p53
        %p251 = pneg %p50
        %s252 = smul.u32 2, %s23
        %p253 = scmp.lt.s32.totalorder %s22, 1
        %s254 = scalar_select %p253, %s22, 1
        %p255 = scmp.lt.s32.totalorder %s252, 1
        %s256 = scalar_select %p255, %s252, 1
        %s257 = smul.addr %s254, 2
        %s258 = sadd.s32 %s256, %s257
        %s259 = smul.addr %s258, 8
        %s260 = scalar_lea.vmem %s1, %s259
        %p261 = pneg %p81
        %p262 = pneg %p78
        %s263 = smul.u32 2, %s23
        %p264 = scmp.lt.s32.totalorder %s22, 1
        %s265 = scalar_select %p264, %s22, 1
        %p266 = scmp.lt.s32.totalorder %s263, 1
        %s267 = scalar_select %p266, %s263, 1
        %s268 = smul.addr %s265, 2
        %s269 = sadd.s32 %s267, %s268
        %s270 = smul.addr %s269, 8
        %s271 = scalar_lea.vmem %s2, %s270
        %p272 = pneg %p109
        %p273 = pneg %p106
        %s274 = smul.u32 2, %s23
        %p275 = scmp.lt.s32.totalorder %s22, 1
        %s276 = scalar_select %p275, %s22, 1
        %p277 = scmp.lt.s32.totalorder %s274, 1
        %s278 = scalar_select %p277, %s274, 1
        %s279 = smul.addr %s276, 2
        %s280 = sadd.s32 %s278, %s279
        %s281 = smul.addr %s280, 4
        %s282 = scalar_lea.vmem %s3, %s281
        %p283 = pneg %p137
        %p284 = pneg %p134
        %p285 = pneg %p163
        %p286 = pneg %p160
        %s287 = sand.u32 %s150, 1
        %s288 = scalar_lea.sflag [#allocation3], %s287
        %s289 = sand.u32 %s150, 1
        %s290 = smul.addr %s289, 16
        %s291 = scalar_lea.vmem [#allocation2], %s290
        %s292 = smul.u32 2, %s23
        %p293 = scmp.lt.s32.totalorder %s22, 1
        %s294 = scalar_select %p293, %s22, 1
        %p295 = scmp.lt.s32.totalorder %s292, 1
        %s296 = scalar_select %p295, %s292, 1
        %s297 = smul.addr %s294, 2
        %s298 = sadd.s32 %s296, %s297
        %s299 = smul.addr %s298, 8
        %s300 = scalar_lea.vmem %s0, %s299
        %s301 = smul.u32 2, %s23
        %s302 = smul.u32 2, %s23
        %p303 = scmp.lt.s32.totalorder %s22, 1
        %s304 = scalar_select %p303, %s22, 1
        %p305 = scmp.lt.s32.totalorder %s302, 1
        %s306 = scalar_select %p305, %s302, 1
        %s307 = smul.addr %s304, 2
        %s308 = sadd.s32 %s306, %s307
        %s309 = smul.addr %s308, 8
        %s310 = scalar_lea.vmem %s1, %s309
        %s311 = smul.u32 2, %s23
        %s312 = smul.u32 2, %s23
        %p313 = scmp.lt.s32.totalorder %s22, 1
        %s314 = scalar_select %p313, %s22, 1
        %p315 = scmp.lt.s32.totalorder %s312, 1
        %s316 = scalar_select %p315, %s312, 1
        %s317 = smul.addr %s314, 2
        %s318 = sadd.s32 %s316, %s317
        %s319 = smul.addr %s318, 8
        %s320 = scalar_lea.vmem %s2, %s319
        %s321 = smul.u32 2, %s23
        %s322 = smul.u32 2, %s23
        %p323 = scmp.lt.s32.totalorder %s22, 1
        %s324 = scalar_select %p323, %s22, 1
        %p325 = scmp.lt.s32.totalorder %s322, 1
        %s326 = scalar_select %p325, %s322, 1
        %s327 = smul.addr %s324, 2
        %s328 = sadd.s32 %s326, %s327
        %s329 = smul.addr %s328, 4
        %s330 = scalar_lea.vmem %s3, %s329
        %s331 = smul.u32 2, %s23
        %p332 = scmp.eq.s32.totalorder %s23, 0
        // Predicated region
        $region37: #{tpu_custom_call.1} parent=35 // pred_check
          %p333 = pneg %p332
        $region38: #{tpu_custom_call.1} parent=35 // pred_check_branch
          %335 = sbr.rel (%p333) target = $region40
        $region39: #{tpu_custom_call.1} parent=35 // pred_region
          %336 = vst [vmem:[%s291] sm:$0xff] 0.0
          %337 = vst [vmem:[%s291 + $0x8] sm:$0xff] 0.0
        $region40: #{tpu_custom_call.1} parent=35 // pred_fallthru
          _
        %v338 = vld [vmem:[%s300] sm:$0x1f]
        %v339 = vld [vmem:[%s300 + $0x8] sm:$0x1f]
        %v340 = vld [vmem:[%s330] sm:$0xff]
        %v341 = vlaneseq
        %v342 = vand.u32 %v341, 127
        %v343 = vadd.s32 %v342, 128
        %s344 = smul.u32 %s23, 256
        %v345 = vstv %s344
        %v346 = vadd.s32 %v345, %v342
        %v347 = vadd.s32 %v345, %v343
        %vm348 = vcmp.lt.s32.totalorder %v346, 256
        %vm349 = vcmp.lt.s32.totalorder %v347, 256
        %v350 = vsel %vm348, 1, 0
        %v351 = vsel %vm349, 1, 0
        %v352 = vcvt.s32.f32 %v350
        %v353 = vcvt.s32.f32 %v351
        %v354 = vcvt.f32.s32.to.zero.pseudo %v340
        %vm355 = vcmask 1044480
        %v356 = vsel %vm355, %v338, -inf
        %v357 = vrot.slane %v356, 4
        %v358 = vmax.f32 %v356, %v357
        %v359 = vrot.slane %v358, 2
        %v360 = vmax.f32 %v358, %v359
        %v361 = vrot.slane %v360, 1
        %v362 = vmax.f32 %v360, %v361
        %v363 = vsel %vm355, %v339, -inf
        %v364 = vrot.slane %v363, 4
        %v365 = vmax.f32 %v363, %v364
        %v366 = vrot.slane %v365, 2
        %v367 = vmax.f32 %v365, %v366
        %v368 = vrot.slane %v367, 1
        %v369 = vmax.f32 %v367, %v368
        %v370 = vsub.f32 %v338, %v362
        %v371 = vsub.f32 %v339, %v369
        %v372 = vmul.f32 %v370, 1.442695
        %v373 = vpow.pop %v372
        %v374 = vmul.f32 %v371, 1.442695
        %v375 = vpow.pop %v374
        %v376 = vsel %vm355, %v373, 0.0
        %v377 = vrot.slane %v376, 4
        %v378 = vadd.f32 %v376, %v377
        %v379 = vrot.slane %v378, 2
        %v380 = vadd.f32 %v378, %v379
        %v381 = vrot.slane %v380, 1
        %v382 = vadd.f32 %v380, %v381
        %v383 = vsel %vm355, %v375, 0.0
        %v384 = vrot.slane %v383, 4
        %v385 = vadd.f32 %v383, %v384
        %v386 = vrot.slane %v385, 2
        %v387 = vadd.f32 %v385, %v386
        %v388 = vrot.slane %v387, 1
        %v389 = vadd.f32 %v387, %v388
        %v390 = vlaneseq
        %v391 = vshrl.u32 %v390, 7
        %v392 = vlaneseq
        %v393 = vshrl.u32 %v392, 7
        %v394 = vsub.s32 0, %v393
        %v395 = vrot.slane %v354, %v394
        %v396 = vlaneseq
        %v397 = vshrl.u32 %v396, 7
        %v398 = vsub.s32 4, %v397
        %v399 = vrot.slane %v354, %v398
        %v400 = vlaneseq
        %v401 = vshrl.u32 %v400, 7
        %v402 = vsub.s32 0, %v401
        %v403 = vrot.slane %v395, %v402
        %v404 = vlaneseq
        %v405 = vshrl.u32 %v404, 7
        %v406 = vsub.s32 0, %v405
        %v407 = vrot.slane %v399, %v406
        %vm408 = vcmp.eq.s32.totalorder %v391, %v403
        %vm409 = vcmp.eq.s32.totalorder %v391, %v407
        %v410 = vsel %vm408, 1, 0
        %v411 = vsel %vm409, 1, 0
        %v412 = vcvt.s32.f32 %v410
        %v413 = vcvt.s32.f32 %v411
        %v414 = vmul.f32 %v412, %v370
        %v415 = vmul.f32 %v413, %v371
        %v416 = vsel %vm355, %v414, 0.0
        %v417 = vrot.slane %v416, 4
        %v418 = vadd.f32 %v416, %v417
        %v419 = vrot.slane %v418, 2
        %v420 = vadd.f32 %v418, %v419
        %v421 = vrot.slane %v420, 1
        %v422 = vadd.f32 %v420, %v421
        %v423 = vsel %vm355, %v415, 0.0
        %v424 = vrot.slane %v423, 4
        %v425 = vadd.f32 %v423, %v424
        %v426 = vrot.slane %v425, 2
        %v427 = vadd.f32 %v425, %v426
        %v428 = vrot.slane %v427, 1
        %v429 = vadd.f32 %v427, %v428
        %v430 = vmul.f32 %v412, %v373
        %v431 = vmul.f32 %v413, %v375
        %v432 = vsel %vm355, %v430, 0.0
        %v433 = vrot.slane %v432, 4
        %v434 = vadd.f32 %v432, %v433
        %v435 = vrot.slane %v434, 2
        %v436 = vadd.f32 %v434, %v435
        %v437 = vrot.slane %v436, 1
        %v438 = vadd.f32 %v436, %v437
        %v439 = vsel %vm355, %v431, 0.0
        %v440 = vrot.slane %v439, 4
        %v441 = vadd.f32 %v439, %v440
        %v442 = vrot.slane %v441, 2
        %v443 = vadd.f32 %v441, %v442
        %v444 = vrot.slane %v443, 1
        %v445 = vadd.f32 %v443, %v444
        %v446 = vrcp.pop %v382
        %v447 = vmul.f32 %v438, %v446
        %v448 = vrcp.pop %v389
        %v449 = vmul.f32 %v445, %v448
        %v450 = vlog2.pop %v382
        %v451 = vmul.f32 %v450, 0.6931472
        %v452 = vlog2.pop %v389
        %v453 = vmul.f32 %v452, 0.6931472
        %v454 = vsub.f32 %v422, %v451
        %v455 = vsub.f32 %v429, %v453
        %v456 = vsub.f32 1.0, %v447
        %v457 = vsub.f32 1.0, %v449
        %v458 = vmul.f32 %v456, %v456
        %v459 = vmul.f32 %v457, %v457
        %vm460 = vcmp.eq.s32.totalorder %v354, 0
        %v461 = vsel %vm460, 0.1, 1.0
        %vm462 = vcmp.eq.s32.totalorder %v354, 1
        %v463 = vsel %vm462, 0.2, %v461
        %vm464 = vcmp.eq.s32.totalorder %v354, 2
        %v465 = vsel %vm464, 1.0, %v463
        %vm466 = vcmp.eq.s32.totalorder %v354, 3
        %v467 = vsel %vm466, 0.3, %v465
        %vm468 = vcmp.eq.s32.totalorder %v354, 4
        %v469 = vsel %vm468, 0.2, %v467
        %v470 = vmul.f32 %v469, -0.25
        %v473 = vcombine.low %v458, %v459
        %v475 = vmul.f32 %v470, %v473
        %v478 = vcombine.low %v454, %v455
        %v480 = vmul.f32 %v475, %v478
        %vm481 = vcmp.gt.f32.partialorder %v340, 0.5
        %v482 = vcombine.low %v350, %v351
        %v483 = vrot.slane %v482, 7
        %vm484 = vcmp.ne.s32.totalorder %v483, 0
        %vm485 = vmand %vm481, %vm484
        %v487 = vrot.slane %v480, 7
        %v489 = vsel %vm485, %v487, 0.0
        %v490 = vsel %vm485, 1, 0
        %v491 = vcvt.s32.f32 %v490
        %vm492 = vcmp.gt.s32.totalorder %v354, 0
        %v493 = vrot.slane %v490, 5
        %v494 = vrot.slane %v493, 4
        %vm495 = vcmp.ne.s32.totalorder %v494, 0
        %vm496 = vmand %vm492, %vm495
        %v497 = vld [vmem:[%s310] sm:$0x3f]
        %v498 = vld [vmem:[%s310 + $0x8] sm:$0x3f]
        %v499 = vld [vmem:[%s320] sm:$0x3f]
        %v500 = vld [vmem:[%s320 + $0x8] sm:$0x3f]
        %v501 = vsub.f32 %v497, %v499
        %v502 = vsub.f32 %v498, %v500
        %v503 = vand.u32 2147483647, %v501
        %v504 = vand.u32 2147483647, %v502
        %vm505 = vcmp.lt.f32.partialorder %v503, 1.0
        %vm506 = vcmp.lt.f32.partialorder %v504, 1.0
        %v507 = vmul.f32 %v501, 0.5
        %v508 = vmul.f32 %v502, 0.5
        %v509 = vmul.f32 %v507, %v501
        %v510 = vmul.f32 %v508, %v502
        %v511 = vsub.f32 %v503, 0.5
        %v512 = vsub.f32 %v504, 0.5
        %v513 = vsel %vm505, %v509, %v511
        %v514 = vsel %vm506, %v510, %v512
        %vm515 = vcmask 1045504
        %v516 = vsel %vm515, %v513, 0.0
        %v517 = vrot.slane %v516, 4
        %v518 = vadd.f32 %v516, %v517
        %v519 = vrot.slane %v518, 2
        %v520 = vadd.f32 %v518, %v519
        %v521 = vrot.slane %v520, 1
        %v522 = vadd.f32 %v520, %v521
        %v523 = vsel %vm515, %v514, 0.0
        %v524 = vrot.slane %v523, 4
        %v525 = vadd.f32 %v523, %v524
        %v526 = vrot.slane %v525, 2
        %v527 = vadd.f32 %v525, %v526
        %v528 = vrot.slane %v527, 1
        %v529 = vadd.f32 %v527, %v528
        %v532 = vcombine.low %v522, %v529
        %v534 = vsel %vm496, %v532, 0.0
        %v535 = vsel %vm496, 1, 0
        %v536 = vcvt.s32.f32 %v535
        %v537 = vmax.f32 %v340, 0.0
        %v539 = vrot.slane %v340, 5
        %v540 = vrot.slane %v539, 4
        %v542 = vmul.f32 %v340, %v540
        %v543 = vsub.f32 %v537, %v542
        %v544 = vand.u32 2147483647, %v340
        %v545 = vsub.f32 0.0, %v544
        %v546 = vmul.f32 %v545, 1.442695
        %v547 = vpow.pop %v546
        %v548 = vadd.f32 %v547, 1.0
        %v549 = vlog2.pop %v548
        %v550 = vmul.f32 %v549, 0.6931472
        %v551 = vmul.f32 -0.5, %v547
        %v552 = vadd.f32 %v551, 1.0
        %v553 = vmul.f32 %v552, %v547
        %v554 = vand.u32 2147483647, %v547
        %vm555 = vcmp.lt.f32.partialorder %v554, 0.0004427343
        %v556 = vsel %vm555, %v553, %v550
        %v557 = vadd.f32 %v543, %v556
        %v559 = vlaneseq
        %v560 = vshrl.u32 %v559, 7
        %v561 = vsub.s32 2, %v560
        %v562 = vrot.slane %v557, %v561
        %v563 = vlaneseq
        %v564 = vshrl.u32 %v563, 7
        %v565 = vsub.s32 6, %v564
        %v566 = vrot.slane %v557, %v565
        %v569 = vsel %vm348, %v562, 0.0
        %v570 = vsel %vm349, %v566, 0.0
        %v571 = vld [vmem:[%s291] ss:$8 sm:$0x3]
        %v574 = vunpack.c.l.s4 1966171168
        %v575 = vunpack.c.0.s8 %v574
        %v576 = vlaneseq
        %v577 = vshrl.u32 %v576, 7
        %v578 = vsub.s32 %v575, %v577
        %v579 = vrot.slane %v489, %v578
        %v580 = vcombine.high %v579, %v579
        %v582 = vunpack.c.l.s4 1966171168
        %v583 = vunpack.c.0.s8 %v582
        %v584 = vlaneseq
        %v585 = vshrl.u32 %v584, 7
        %v586 = vsub.s32 %v583, %v585
        %v587 = vrot.slane %v580, %v586
        %v589 = vadd.f32 %v571, %v587
        %v590 = vlaneseq
        %vm591 = vcmp.ge.s32.totalorder %v590, 0
        %vm592 = vcmp.lt.s32.totalorder %v590, 256
        %vm593 = vmand %vm591, %vm592
        %594 = vst.msk [vmem:[%s291] ss:$8 sm:$0x3] %vm593, %v589
        %595 = vst.msk [vmem:[%s291] ss:$8 sm:$0x0] %vm593, %v589
        %s596 = scalar_lea.vmem %s291, 1 [#allocation2]
        %v597 = vld [vmem:[%s596] ss:$8 sm:$0x3]
        %v600 = vunpack.c.l.s4 1966171168
        %v601 = vunpack.c.0.s8 %v600
        %v602 = vlaneseq
        %v603 = vshrl.u32 %v602, 7
        %v604 = vsub.s32 %v601, %v603
        %v605 = vrot.slane %v491, %v604
        %v606 = vcombine.high %v605, %v605
        %v608 = vunpack.c.l.s4 1966171168
        %v609 = vunpack.c.0.s8 %v608
        %v610 = vlaneseq
        %v611 = vshrl.u32 %v610, 7
        %v612 = vsub.s32 %v609, %v611
        %v613 = vrot.slane %v606, %v612
        %v615 = vadd.f32 %v597, %v613
        %616 = vst.msk [vmem:[%s596] ss:$8 sm:$0x3] %vm593, %v615
        %617 = vst.msk [vmem:[%s596] ss:$8 sm:$0x0] %vm593, %v615
        %s618 = scalar_lea.vmem %s291, 2 [#allocation2]
        %v619 = vld [vmem:[%s618] ss:$8 sm:$0x3]
        %v622 = vunpack.c.l.s4 1966171168
        %v623 = vunpack.c.0.s8 %v622
        %v624 = vlaneseq
        %v625 = vshrl.u32 %v624, 7
        %v626 = vsub.s32 %v623, %v625
        %v627 = vrot.slane %v534, %v626
        %v629 = vunpack.c.l.s4 1966171168
        %v630 = vunpack.c.0.s8 %v629
        %v631 = vlaneseq
        %v632 = vshrl.u32 %v631, 7
        %v633 = vsub.s32 %v630, %v632
        %v634 = vrot.slane %v627, %v633
        %v636 = vadd.f32 %v619, %v634
        %637 = vst.msk [vmem:[%s618] ss:$8 sm:$0x3] %vm593, %v636
        %638 = vst.msk [vmem:[%s618] ss:$8 sm:$0x0] %vm593, %v636
        %s639 = scalar_lea.vmem %s291, 3 [#allocation2]
        %v640 = vld [vmem:[%s639] ss:$8 sm:$0x3]
        %v643 = vunpack.c.l.s4 1966171168
        %v644 = vunpack.c.0.s8 %v643
        %v645 = vlaneseq
        %v646 = vshrl.u32 %v645, 7
        %v647 = vsub.s32 %v644, %v646
        %v648 = vrot.slane %v536, %v647
        %v650 = vunpack.c.l.s4 1966171168
        %v651 = vunpack.c.0.s8 %v650
        %v652 = vlaneseq
        %v653 = vshrl.u32 %v652, 7
        %v654 = vsub.s32 %v651, %v653
        %v655 = vrot.slane %v648, %v654
        %v657 = vadd.f32 %v640, %v655
        %658 = vst.msk [vmem:[%s639] ss:$8 sm:$0x3] %vm593, %v657
        %659 = vst.msk [vmem:[%s639] ss:$8 sm:$0x0] %vm593, %v657
        %s660 = scalar_lea.vmem %s291, 4 [#allocation2]
        %v661 = vld [vmem:[%s660] ss:$8 sm:$0x3]
        %v664 = vcombine.low %v569, %v570
        %v666 = vunpack.c.l.s4 1966171168
        %v667 = vunpack.c.0.s8 %v666
        %v668 = vlaneseq
        %v669 = vshrl.u32 %v668, 7
        %v670 = vsub.s32 %v667, %v669
        %v671 = vrot.slane %v664, %v670
        %v673 = vunpack.c.l.s4 1966171168
        %v674 = vunpack.c.0.s8 %v673
        %v675 = vlaneseq
        %v676 = vshrl.u32 %v675, 7
        %v677 = vsub.s32 %v674, %v676
        %v678 = vrot.slane %v671, %v677
        %v680 = vadd.f32 %v661, %v678
        %681 = vst.msk [vmem:[%s660] ss:$8 sm:$0x3] %vm593, %v680
        %682 = vst.msk [vmem:[%s660] ss:$8 sm:$0x0] %vm593, %v680
        %s683 = scalar_lea.vmem %s291, 5 [#allocation2]
        %v684 = vld [vmem:[%s683] ss:$8 sm:$0x3]
        %v687 = vcombine.low %v352, %v353
        %v689 = vunpack.c.l.s4 1966171168
        %v690 = vunpack.c.0.s8 %v689
        %v691 = vlaneseq
        %v692 = vshrl.u32 %v691, 7
        %v693 = vsub.s32 %v690, %v692
        %v694 = vrot.slane %v687, %v693
        %v696 = vunpack.c.l.s4 1966171168
        %v697 = vunpack.c.0.s8 %v696
        %v698 = vlaneseq
        %v699 = vshrl.u32 %v698, 7
        %v700 = vsub.s32 %v697, %v699
        %v701 = vrot.slane %v694, %v700
        %v703 = vadd.f32 %v684, %v701
        %704 = vst.msk [vmem:[%s683] ss:$8 sm:$0x3] %vm593, %v703
        %705 = vst.msk [vmem:[%s683] ss:$8 sm:$0x0] %vm593, %v703
        %s706 = sand.u32 %s150, 1
        %s707 = scalar_lea.sflag [#allocation3], %s706
        %s708 = sand.u32 %s150, 1
        %s709 = smul.addr %s708, 16
        %s710 = scalar_lea.vmem [#allocation2], %s709
        // Predicated region
        $region41: #{tpu_custom_call.1} parent=35 // pred_check
          %p711 = pneg %p160
        $region42: #{tpu_custom_call.1} parent=35 // pred_check_branch
          %713 = sbr.rel (%p711) target = $region44
        $region43: #{tpu_custom_call.1} parent=35 // pred_region
          %s715 = ssub.s32 256, 256
          %716 = vsyncadd %s707, %s715
          %s717 = smul.addr %s22, 2
          %s718 = smul.addr %s717, 128
          %s719 = scalar_lea.hbm %s4, %s718
          %s721 = sshll.u32 %s710, 4
          %s722 = int_to_ptr.vmem [resolvable:$true] %s721
          %724 = dma.vmem_to_hbm [thread:$0]  %s722, 256, %s719, %s707
        $region44: #{tpu_custom_call.1} parent=35 // pred_fallthru
          _
      $region36: #{tpu_custom_call.1} parent=5 // pred_fallthru
        _
      %p725 = scmp.le.s32.totalorder 2, %s13
      // Predicated region
      $region45: #{tpu_custom_call.1} parent=5 // pred_check
        %p726 = pneg %p725
      $region46: #{tpu_custom_call.1} parent=5 // pred_check_branch
        %728 = sbr.rel (%p726) target = $region48
      $region47: #{tpu_custom_call.1} parent=5 // pred_region
        %s729 = ssub.s32 %s13, 2
        // Predicated region
        $region49: #{tpu_custom_call.1} parent=47 // pred_check
          %p730 = pneg %p166
        $region50: #{tpu_custom_call.1} parent=47 // pred_check_branch
          %732 = sbr.rel (%p730) target = $region52
        $region51: #{tpu_custom_call.1} parent=47 // pred_region
          %s733 = sand.u32 %s151, 1
          %s734 = scalar_lea.sflag [#allocation3], %s733
          %s735 = sand.u32 %s151, 1
          %s736 = smul.addr %s735, 16
          %s737 = scalar_lea.vmem [#allocation2], %s736
          %738 = dma.done %s734, 256
        $region52: #{tpu_custom_call.1} parent=47 // pred_fallthru
          _
      $region48: #{tpu_custom_call.1} parent=5 // pred_fallthru
        _
    $region6: #{tpu_custom_call.1} parent=1 // loop_footer
      %s17 = sadd.s32 1, %s13
    $region7: #{tpu_custom_call.1} parent=1 // loop_footer_branch
      %12 = sbr.rel target = $region3
    $region8: #{tpu_custom_call.1} parent=1 // loop_exit
      _
    %739 = vsyncpa [#allocation3], 1
    %s740 = scalar_lea.sflag [#allocation3], 1
    %741 = vsyncpa %s740, 1

</llo_original>
